<compile_context>
chip_gen: v6e
topology: v6e:2x2x1
jax: 0.10.0
libtpu: 0.0.40
codegen_flags: <defaults>
</compile_context>

<pallas_src>
import math

import jax
import jax.numpy as jnp
from jax import lax
from jax.experimental import pallas as pl
from jax.experimental.pallas import tpu as pltpu

# ---------------- Sinkhorn hyper-parameters (match the reference WassLoss) ---
SINKHORN_EPS = 1e-3
SINKHORN_MAX_ITER = 100
SINKHORN_THRESH = 1e-1   # early-break threshold used by the reference implementation


# --------------------------- fused loss kernel -------------------------------
def _loss_kernel(params_ref, sigma_ref, y_ref, a_ref, b_ref, out_ref):
    # ---- scalars (SMEM): params = [alpha, beta] ----
    alpha = params_ref[0]
    beta = params_ref[1]

    # ---------------- BCE (lane-dense (1, N) layout) --------------------------
    s = sigma_ref[...].astype(jnp.float32)            # (1, N)
    y = y_ref[...].astype(jnp.float32)                # (1, N)
    # nn.BCELoss clamps the log terms at -100
    log_s = jnp.maximum(jnp.log(s), -100.0)
    log_1ms = jnp.maximum(jnp.log(1.0 - s), -100.0)
    bce = jnp.mean(-(y * log_s + (1.0 - y) * log_1ms), keepdims=True)   # (1, 1)

    # ---------------- Sinkhorn distance ---------------------------------------
    a = a_ref[...].astype(jnp.float32)                # (n0, d)
    b = b_ref[...].astype(jnp.float32)                # (n1, d)
    n0, d = a.shape
    n1 = b.shape[0]

    # Cost matrix C_ij = ||a_i - b_j||^2 (p = 2, no sqrt), but never materialized:
    # we build K = -C/eps directly (the only form the loop needs) and recover the
    # final cost as -eps * sum(pi * K).
    # Cross term via NT dot_general -> MXU consumes the contraction directly,
    # no materialized b.T.
    ab = lax.dot_general(a, b, (((1,), (1,)), ((), ())),
                         preferred_element_type=jnp.float32)            # (n0, n1)
    aa = jnp.sum(a * a, axis=-1, keepdims=True)                          # (n0, 1)
    # ||b_j||^2 produced directly as a (1, n1) row (ones @ (b*b)^T contraction),
    # avoiding a keepdims-sum followed by a transpose.
    bb = lax.dot_general(jnp.ones((1, d), jnp.float32), b * b,
                         (((1,), (1,)), ((), ())),
                         preferred_element_type=jnp.float32)             # (1, n1)
    # -C = min(2ab - aa - bb, 0); 1/eps scaling hoisted out of the loop: the loop
    # carries scaled potentials u_s = u/eps, v_s = v/eps so the modified cost is
    # just K + u_s + v_s (no per-iteration divide).
    K = jnp.minimum(2.0 * ab - aa - bb, 0.0) * (1.0 / SINKHORN_EPS)      # (n0, n1)

    log_mu = math.log(1.0 / n0 + 1e-8)     # trace-time constants (mu, nu uniform)
    log_nu = math.log(1.0 / n1 + 1e-8)

    def lse_rows(m):   # logsumexp over the lane (last) axis -> (n0, 1)
        mx = jnp.max(m, axis=-1, keepdims=True)
        return mx + jnp.log(jnp.sum(jnp.exp(m - mx), axis=-1, keepdims=True))

    def lse_cols(m):   # logsumexp over the sublane axis -> (1, n1)
        # Intentionally NOT done via a K^T copy: the binding unit at scale is the
        # single EUP slot (exp/log); the cross-vreg sublane adds co-issue under it
        # and a resident K^T would double the (n0,n1) VMEM footprint.
        mx = jnp.max(m, axis=-2, keepdims=True)
        return mx + jnp.log(jnp.sum(jnp.exp(m - mx), axis=-2, keepdims=True))

    # Real early exit (reference breaks once err < thresh, after completing the
    # iteration that produced it).
    def cond(carry):
        i, _, _, err = carry
        return jnp.logical_and(i < SINKHORN_MAX_ITER, err >= SINKHORN_THRESH)

    def body(carry):
        i, u_s, v_s, _ = carry
        Kv = K + v_s                                     # shared partial, reused twice
        u_new = (log_mu - lse_rows(Kv + u_s)) + u_s
        v_new = (log_nu - lse_cols(Kv + u_new)) + v_s
        # reference err = sum|u_new - u_old| in unscaled coordinates
        err = SINKHORN_EPS * jnp.sum(jnp.abs(u_new - u_s))
        return (i + 1, u_new, v_new, err)

    carry0 = (jnp.array(0, jnp.int32),
              jnp.zeros((n0, 1), jnp.float32),
              jnp.zeros((1, n1), jnp.float32),
              jnp.array(jnp.inf, jnp.float32))
    _, u_s, v_s, _ = lax.while_loop(cond, body, carry0)

    pi = jnp.exp(K + u_s + v_s)                          # transport plan
    # sum(pi * C) with C = -eps * K, without a resident C matrix.
    wass = (-SINKHORN_EPS) * jnp.sum(pi * K, keepdims=True)   # (1, 1)

    # ---------------- combine: beta * BCE + alpha * Wasserstein ---------------
    out_ref[...] = beta * bce + alpha * wass


# ------------------------------- glue (JAX) ----------------------------------
def sepr_repr(psi):
    # TODO(synk): sepr_repr's source is not in the provided module; it splits the
    # representation by the treatment indicator (last column). Rows here are
    # constructed ordered t=0 then t=1 with equal group sizes, so a static half
    # split is used (data-dependent group sizes have no static-shape equivalent).
    n = psi.shape[0]
    phi = psi[:, :-1]
    return phi[: n // 2], phi[n // 2:]


def _vmem_budget_bytes():
    """Generation-aware whole-matrix VMEM ceiling (~75% of physical VMEM)."""
    try:
        phys = pltpu.get_tpu_info().vmem_capacity_bytes   # 128 MiB v5e/v6e, 64 MiB v7x
    except Exception:
        phys = 64 * 1024 * 1024                            # conservative fallback (v7x)
    return (3 * phys) // 4


def loss_forward(phi_t, sigma, y_train, alpha, beta=1.0):
    """Forward pass of `Loss` (single fused Pallas kernel)."""
    # TODO(synk): forward only; no custom_vjp is defined, so this is not meant to
    # be differentiated through (the PyTorch module's .item() side effects
    # self.wd / self.cl also have no kernel equivalent).
    s = sigma.reshape(1, -1).astype(jnp.float32)        # lane-dense (1, N)
    y = y_train.reshape(1, -1).astype(jnp.float32)      # lane-dense (1, N)
    psi0, psi1 = sepr_repr(phi_t)
    n0, d = psi0.shape
    n1 = psi1.shape[0]
    n_bce = s.shape[1]

    # Whole-matrix Sinkhorn VMEM estimate: K resident + ~3 live (n0, n1) f32
    # temporaries per iteration + inputs (C is no longer materialized).
    # TODO(synk): tile the n1 axis with a streaming logsumexp for batches that
    # exceed the generation budget.
    approx_vmem = 4 * (4 * n0 * n1 + 2 * (n0 + n1) * d + 2 * n_bce)
    budget = _vmem_budget_bytes()
    assert approx_vmem < budget, (
        f"Sinkhorn operands too large for whole-matrix kernel "
        f"({approx_vmem} B estimate vs {budget} B VMEM budget)")

    # Explicit scoped-VMEM limit: ~2x headroom over the operand estimate for
    # fusion temporaries, floored at 32 MiB, capped at the generation budget
    # (v5e's 16 MiB scoped default would otherwise be the silent failure mode).
    vmem_limit = int(min(max(2 * approx_vmem, 32 * 1024 * 1024), budget))

    # Advisory cost estimate so the surrounding graph doesn't treat the up-to-100
    # serial full-matrix LSE iterations as free.
    cost = pl.CostEstimate(
        flops=int(2 * n0 * n1 * d + SINKHORN_MAX_ITER * 8 * n0 * n1 + 8 * n_bce),
        transcendentals=int((2 * SINKHORN_MAX_ITER + 1) * n0 * n1 + 2 * n_bce),
        bytes_accessed=int(4 * ((n0 + n1) * d + 2 * n_bce + 2 + 1)),
    )

    params = jnp.array([alpha, beta], dtype=jnp.float32)

    out = pl.pallas_call(
        _loss_kernel,
        out_shape=jax.ShapeDtypeStruct((1, 1), jnp.float32),
        in_specs=[
            pl.BlockSpec(memory_space=pltpu.MemorySpace.SMEM),   # [alpha, beta]
            pl.BlockSpec(memory_space=pltpu.MemorySpace.VMEM),   # sigma (1, N)
            pl.BlockSpec(memory_space=pltpu.MemorySpace.VMEM),   # y     (1, N)
            pl.BlockSpec(memory_space=pltpu.MemorySpace.VMEM),   # psi0  (n0, d)
            pl.BlockSpec(memory_space=pltpu.MemorySpace.VMEM),   # psi1  (n1, d)
        ],
        out_specs=pl.BlockSpec(memory_space=pltpu.MemorySpace.VMEM),
        compiler_params=pltpu.CompilerParams(vmem_limit_bytes=vmem_limit),
        cost_estimate=cost,
    )(params, s, y, psi0, psi1)
    return out[0, 0]


# --------------------------------- demo --------------------------------------
if __name__ == "__main__":
    key = jax.random.PRNGKey(0)
    k1, k2, k3 = jax.random.split(key, 3)

    N, D = 8, 32                      # batch of 8 units, 32-dim representation
    alpha, beta = 1.0, 1.0            # "parameters" of Loss.__init__

    # representation + treatment indicator column (first half t=0, second half t=1)
    phi = jax.random.normal(k1, (N, D), dtype=jnp.float32)
    t = jnp.concatenate(
        [jnp.zeros((N // 2, 1), jnp.float32), jnp.ones((N // 2, 1), jnp.float32)], axis=0
    )
    phi_t = jnp.concatenate([phi, t], axis=-1)          # (N, D+1)

    sigma = jax.nn.sigmoid(jax.random.normal(k2, (N,), dtype=jnp.float32))   # (N,)
    y_train = (jax.random.uniform(k3, (N,)) > 0.5).astype(jnp.float32)       # (N,)

    out = loss_forward(phi_t, sigma, y_train, alpha=alpha, beta=beta)
    jax.block_until_ready(out)
    print("KERNEL_OK")
</pallas_src>

<mosaic_0001>
module attributes {stable_mosaic.version = 11 : i64} {
  func.func @_loss_kernel(%arg0: memref<2xf32, #tpu.memory_space<smem>>, %arg1: memref<1x8xf32, #tpu.memory_space<vmem>>, %arg2: memref<1x8xf32, #tpu.memory_space<vmem>>, %arg3: memref<4x32xf32, #tpu.memory_space<vmem>>, %arg4: memref<4x32xf32, #tpu.memory_space<vmem>>, %arg5: memref<1x1xf32, #tpu.memory_space<vmem>>) attributes {dimension_semantics = [], scalar_prefetch = 0 : i64, scratch_operands = 0 : i64, tpu.core_type = #tpu.core_type<tc>} {
    %c0 = arith.constant 0 : index
    %0 = memref.load %arg0[%c0] : memref<2xf32, #tpu.memory_space<smem>>
    %c1 = arith.constant 1 : index
    %1 = memref.load %arg0[%c1] : memref<2xf32, #tpu.memory_space<smem>>
    %c0_0 = arith.constant 0 : index
    %c0_1 = arith.constant 0 : index
    %2 = vector.load %arg1[%c0_0, %c0_1] : memref<1x8xf32, #tpu.memory_space<vmem>>, vector<1x8xf32>
    %c0_2 = arith.constant 0 : index
    %c0_3 = arith.constant 0 : index
    %3 = vector.load %arg2[%c0_2, %c0_3] : memref<1x8xf32, #tpu.memory_space<vmem>>, vector<1x8xf32>
    %4 = math.log %2 : vector<1x8xf32>
    %cst = arith.constant -1.000000e+02 : f32
    %5 = vector.broadcast %cst : f32 to vector<1x8xf32>
    %6 = arith.maximumf %4, %5 : vector<1x8xf32>
    %cst_4 = arith.constant 1.000000e+00 : f32
    %7 = vector.broadcast %cst_4 : f32 to vector<1x8xf32>
    %8 = arith.subf %7, %2 : vector<1x8xf32>
    %9 = math.log %8 : vector<1x8xf32>
    %cst_5 = arith.constant -1.000000e+02 : f32
    %10 = vector.broadcast %cst_5 : f32 to vector<1x8xf32>
    %11 = arith.maximumf %9, %10 : vector<1x8xf32>
    %12 = arith.mulf %3, %6 : vector<1x8xf32>
    %cst_6 = arith.constant 1.000000e+00 : f32
    %13 = vector.broadcast %cst_6 : f32 to vector<1x8xf32>
    %14 = arith.subf %13, %3 : vector<1x8xf32>
    %15 = arith.mulf %14, %11 : vector<1x8xf32>
    %16 = arith.addf %12, %15 : vector<1x8xf32>
    %cst_7 = arith.constant 0.000000e+00 : f32
    %17 = vector.broadcast %cst_7 : f32 to vector<1x8xf32>
    %18 = arith.subf %17, %16 : vector<1x8xf32>
    %19 = vector.shape_cast %18 : vector<1x8xf32> to vector<1x1x8xf32>
    %cst_8 = arith.constant dense<0.000000e+00> : vector<1xf32>
    %20 = vector.multi_reduction <add>, %19, %cst_8 [1, 2] : vector<1x1x8xf32> to vector<1xf32>
    %21 = vector.shape_cast %20 : vector<1xf32> to vector<1x1x1xf32>
    %22 = vector.extract %21[0, 0, 0] : f32 from vector<1x1x1xf32>
    %23 = vector.broadcast %22 : f32 to vector<1x1xf32>
    %cst_9 = arith.constant 8.000000e+00 : f32
    %24 = vector.broadcast %cst_9 : f32 to vector<1x1xf32>
    %25 = arith.divf %23, %24 : vector<1x1xf32>
    %c0_10 = arith.constant 0 : index
    %c0_11 = arith.constant 0 : index
    %26 = vector.load %arg3[%c0_10, %c0_11] : memref<4x32xf32, #tpu.memory_space<vmem>>, vector<4x32xf32>
    %c0_12 = arith.constant 0 : index
    %c0_13 = arith.constant 0 : index
    %27 = vector.load %arg4[%c0_12, %c0_13] : memref<4x32xf32, #tpu.memory_space<vmem>>, vector<4x32xf32>
    %cst_14 = arith.constant dense<0.000000e+00> : vector<4x4xf32>
    %28 = tpu.matmul %26, %27, %cst_14 {dimension_numbers = #tpu.dot_dimension_numbers<[1], [1], [0], [0], [0, 0, 1, 0], [], []>} : vector<4x32xf32>, vector<4x32xf32>, vector<4x4xf32> -> vector<4x4xf32>
    %29 = arith.mulf %26, %26 : vector<4x32xf32>
    %cst_15 = arith.constant dense<0.000000e+00> : vector<4xf32>
    %30 = vector.multi_reduction <add>, %29, %cst_15 [1] : vector<4x32xf32> to vector<4xf32>
    %31 = vector.shape_cast %30 : vector<4xf32> to vector<4x1xf32>
    %cst_16 = arith.constant 1.000000e+00 : f32
    %32 = vector.broadcast %cst_16 : f32 to vector<1x32xf32>
    %33 = arith.mulf %27, %27 : vector<4x32xf32>
    %cst_17 = arith.constant dense<0.000000e+00> : vector<1x4xf32>
    %34 = tpu.matmul %32, %33, %cst_17 {dimension_numbers = #tpu.dot_dimension_numbers<[1], [1], [0], [0], [0, 0, 1, 0], [], []>} : vector<1x32xf32>, vector<4x32xf32>, vector<1x4xf32> -> vector<1x4xf32>
    %cst_18 = arith.constant 2.000000e+00 : f32
    %35 = vector.broadcast %cst_18 : f32 to vector<4x4xf32>
    %36 = arith.mulf %35, %28 : vector<4x4xf32>
    %37 = vector.broadcast %31 : vector<4x1xf32> to vector<4x4xf32>
    %38 = arith.subf %36, %37 : vector<4x4xf32>
    %39 = vector.broadcast %34 : vector<1x4xf32> to vector<4x4xf32>
    %40 = arith.subf %38, %39 : vector<4x4xf32>
    %cst_19 = arith.constant 0.000000e+00 : f32
    %41 = vector.broadcast %cst_19 : f32 to vector<4x4xf32>
    %42 = arith.minimumf %40, %41 : vector<4x4xf32>
    %cst_20 = arith.constant 1.000000e+03 : f32
    %43 = vector.broadcast %cst_20 : f32 to vector<4x4xf32>
    %44 = arith.mulf %42, %43 : vector<4x4xf32>
    %cst_21 = arith.constant 0.000000e+00 : f32
    %45 = vector.broadcast %cst_21 : f32 to vector<4x1xf32>
    %cst_22 = arith.constant 0.000000e+00 : f32
    %46 = vector.broadcast %cst_22 : f32 to vector<1x4xf32>
    %c0_i32 = arith.constant 0 : i32
    %cst_23 = arith.constant 0x7F800000 : f32
    %47:4 = scf.while (%arg6 = %c0_i32, %arg7 = %45, %arg8 = %46, %arg9 = %cst_23) : (i32, vector<4x1xf32>, vector<1x4xf32>, f32) -> (i32, vector<4x1xf32>, vector<1x4xf32>, f32) {
      %c100_i32 = arith.constant 100 : i32
      %67 = arith.cmpi slt, %arg6, %c100_i32 : i32
      %cst_28 = arith.constant 1.000000e-01 : f32
      %68 = arith.cmpf oge, %arg9, %cst_28 : f32
      %69 = arith.andi %67, %68 : i1
      scf.condition(%69) %arg6, %arg7, %arg8, %arg9 : i32, vector<4x1xf32>, vector<1x4xf32>, f32
    } do {
    ^bb0(%arg6: i32, %arg7: vector<4x1xf32>, %arg8: vector<1x4xf32>, %arg9: f32):
      %67 = vector.broadcast %arg8 : vector<1x4xf32> to vector<4x4xf32>
      %68 = arith.addf %44, %67 : vector<4x4xf32>
      %69 = vector.broadcast %arg7 : vector<4x1xf32> to vector<4x4xf32>
      %70 = arith.addf %68, %69 : vector<4x4xf32>
      %cst_28 = arith.constant dense<0xFF800000> : vector<4xf32>
      %71 = vector.multi_reduction <maximumf>, %70, %cst_28 [1] : vector<4x4xf32> to vector<4xf32>
      %72 = vector.shape_cast %71 : vector<4xf32> to vector<4x1xf32>
      %73 = vector.broadcast %72 : vector<4x1xf32> to vector<4x4xf32>
      %74 = arith.subf %70, %73 : vector<4x4xf32>
      %75 = math.exp %74 : vector<4x4xf32>
      %cst_29 = arith.constant dense<0.000000e+00> : vector<4xf32>
      %76 = vector.multi_reduction <add>, %75, %cst_29 [1] : vector<4x4xf32> to vector<4xf32>
      %77 = vector.shape_cast %76 : vector<4xf32> to vector<4x1xf32>
      %78 = math.log %77 : vector<4x1xf32>
      %79 = arith.addf %72, %78 : vector<4x1xf32>
      %cst_30 = arith.constant -1.38629436 : f32
      %80 = vector.broadcast %cst_30 : f32 to vector<4x1xf32>
      %81 = arith.subf %80, %79 : vector<4x1xf32>
      %82 = arith.addf %81, %arg7 : vector<4x1xf32>
      %83 = vector.broadcast %82 : vector<4x1xf32> to vector<4x4xf32>
      %84 = arith.addf %68, %83 : vector<4x4xf32>
      %cst_31 = arith.constant dense<0xFF800000> : vector<4xf32>
      %85 = vector.multi_reduction <maximumf>, %84, %cst_31 [0] : vector<4x4xf32> to vector<4xf32>
      %86 = vector.shape_cast %85 : vector<4xf32> to vector<1x4xf32>
      %87 = vector.broadcast %86 : vector<1x4xf32> to vector<4x4xf32>
      %88 = arith.subf %84, %87 : vector<4x4xf32>
      %89 = math.exp %88 : vector<4x4xf32>
      %cst_32 = arith.constant dense<0.000000e+00> : vector<4xf32>
      %90 = vector.multi_reduction <add>, %89, %cst_32 [0] : vector<4x4xf32> to vector<4xf32>
      %91 = vector.shape_cast %90 : vector<4xf32> to vector<1x4xf32>
      %92 = math.log %91 : vector<1x4xf32>
      %93 = arith.addf %86, %92 : vector<1x4xf32>
      %cst_33 = arith.constant -1.38629436 : f32
      %94 = vector.broadcast %cst_33 : f32 to vector<1x4xf32>
      %95 = arith.subf %94, %93 : vector<1x4xf32>
      %96 = arith.addf %95, %arg8 : vector<1x4xf32>
      %97 = arith.subf %82, %arg7 : vector<4x1xf32>
      %98 = math.absf %97 : vector<4x1xf32>
      %99 = vector.shape_cast %98 : vector<4x1xf32> to vector<1x4x1xf32>
      %cst_34 = arith.constant dense<0.000000e+00> : vector<1xf32>
      %100 = vector.multi_reduction <add>, %99, %cst_34 [1, 2] : vector<1x4x1xf32> to vector<1xf32>
      %101 = vector.shape_cast %100 : vector<1xf32> to vector<1x1x1xf32>
      %102 = vector.extract %101[0, 0, 0] : f32 from vector<1x1x1xf32>
      %cst_35 = arith.constant 1.000000e-03 : f32
      %103 = arith.mulf %cst_35, %102 : f32
      %c1_i32 = arith.constant 1 : i32
      %104 = arith.addi %arg6, %c1_i32 : i32
      scf.yield %104, %82, %96, %103 : i32, vector<4x1xf32>, vector<1x4xf32>, f32
    }
    %48 = vector.broadcast %47#1 : vector<4x1xf32> to vector<4x4xf32>
    %49 = arith.addf %44, %48 : vector<4x4xf32>
    %50 = vector.broadcast %47#2 : vector<1x4xf32> to vector<4x4xf32>
    %51 = arith.addf %49, %50 : vector<4x4xf32>
    %52 = math.exp %51 : vector<4x4xf32>
    %53 = arith.mulf %52, %44 : vector<4x4xf32>
    %54 = vector.shape_cast %53 : vector<4x4xf32> to vector<1x4x4xf32>
    %cst_24 = arith.constant dense<0.000000e+00> : vector<1xf32>
    %55 = vector.multi_reduction <add>, %54, %cst_24 [1, 2] : vector<1x4x4xf32> to vector<1xf32>
    %56 = vector.shape_cast %55 : vector<1xf32> to vector<1x1x1xf32>
    %57 = vector.extract %56[0, 0, 0] : f32 from vector<1x1x1xf32>
    %58 = vector.broadcast %57 : f32 to vector<1x1xf32>
    %cst_25 = arith.constant -1.000000e-03 : f32
    %59 = vector.broadcast %cst_25 : f32 to vector<1x1xf32>
    %60 = arith.mulf %59, %58 : vector<1x1xf32>
    %61 = vector.broadcast %1 : f32 to vector<1x1xf32>
    %62 = arith.mulf %61, %25 : vector<1x1xf32>
    %63 = vector.broadcast %0 : f32 to vector<1x1xf32>
    %64 = arith.mulf %63, %60 : vector<1x1xf32>
    %65 = arith.addf %62, %64 : vector<1x1xf32>
    %c0_26 = arith.constant 0 : index
    %c0_27 = arith.constant 0 : index
    %66 = vector.load %arg5[%c0_26, %c0_27] : memref<1x1xf32, #tpu.memory_space<vmem>>, vector<1x1xf32>
    tpu.vector_store %arg5[%c0_26, %c0_27], %65 {strides = array<i32>} : memref<1x1xf32, #tpu.memory_space<vmem>>, vector<1x1xf32>,
    return
  }
}

</mosaic_0001>

<llo_original>
// kernel: tpu_custom_call.1
$region0: #{tpu_custom_call.1}
  #allocation0 [shape = 'u32[]', space=smem, size = 0x4, offset = 0x4, fixed_abs, tag = 'smem constant byte address 0x4 - core index']
  #allocation1 [shape = 'u32[144,128]{1,0:T(1,128)}', space=vmem, size = 0x12000, scoped, tag = 'internal scratch']
  %s0 = inlined_call_operand.hbm [shape: f32[2], index: 0, kind: input, shape index: {}]
  %s1 = inlined_call_operand.vmem [shape: f32[1,8], index: 1, kind: input, shape index: {}]
  %s2 = inlined_call_operand.hbm [shape: f32[1,8], index: 2, kind: input, shape index: {}]
  %s3 = inlined_call_operand.vmem [shape: f32[4,32], index: 3, kind: input, shape index: {}]
  %s4 = inlined_call_operand.hbm [shape: f32[4,32], index: 4, kind: input, shape index: {}]
  %s5 = inlined_call_operand.hbm [shape: f32[1,1], index: 5, kind: output, shape index: {}]
  %s6 = sld [smem:[#allocation0]]
  $region49: #{tpu_custom_call.1} parent=0
    _
  %s8 = ssub.s32 1, %s6
  %s9 = scalar_select 0, %s8, %s6
  $region1: #{tpu_custom_call.1} parent=0
    #allocation2 [shape = 'u8[512]{0}', space=smem, size = 0x200, scoped, tag = 'input window, operand 0, single buffered']
    #allocation3 [shape = 's32[1]{0}', space=sflag, size = 0x4, scoped, tag = 'scoped memory for tpu_custom_call.1']
    #allocation4 [shape = 's32[1]{0}', space=sflag, size = 0x4, scoped, tag = 'scoped memory for tpu_custom_call.1']
    #allocation5 [shape = 's32[1]{0}', space=sflag, size = 0x4, scoped, tag = 'scoped memory for tpu_custom_call.1']
    #allocation6 [shape = 'u8[512]{0}', space=vmem, size = 0x400, scoped, tag = 'input window, operand 2, single buffered']
    #allocation7 [shape = 'u8[2048]{0}', space=vmem, size = 0x800, scoped, tag = 'input window, operand 4, single buffered']
    #allocation8 [shape = 's32[1]{0}', space=sflag, size = 0x4, scoped, tag = 'scoped memory for tpu_custom_call.1']
    #allocation9 [shape = 'u8[512]{0}', space=vmem, size = 0x400, scoped, tag = 'output window, operand 0, single buffered']
    %10 = vsyncpa [#allocation5], 0
    %11 = vsyncpa [#allocation3], 0
    %12 = vsyncpa [#allocation8], 0
    %13 = vsyncpa [#allocation4], 0
    // Predicated region
    $region2: #{tpu_custom_call.1} parent=1 // pred_check
      _
    $region3: #{tpu_custom_call.1} parent=1 // pred_check_branch
      %15 = sbr.rel (0) target = $region5
    $region4: #{tpu_custom_call.1} parent=1 // pred_region
      %s17 = ssub.s32 16, 16
      %18 = vsyncadd [#allocation5], %s17
      %21 = dma.hbm_to_smem %s0, 16, [#allocation2], [#allocation5]
    $region5: #{tpu_custom_call.1} parent=1 // pred_fallthru
      _
    // Predicated region
    $region6: #{tpu_custom_call.1} parent=1 // pred_check
      _
    $region7: #{tpu_custom_call.1} parent=1 // pred_check_branch
      %23 = sbr.rel (0) target = $region9
    $region8: #{tpu_custom_call.1} parent=1 // pred_region
      _
    $region9: #{tpu_custom_call.1} parent=1 // pred_fallthru
      _
    // Predicated region
    $region10: #{tpu_custom_call.1} parent=1 // pred_check
      _
    $region11: #{tpu_custom_call.1} parent=1 // pred_check_branch
      %25 = sbr.rel (0) target = $region13
    $region12: #{tpu_custom_call.1} parent=1 // pred_region
      %s27 = ssub.s32 16, 16
      %28 = vsyncadd [#allocation3], %s27
      %s30 = sshll.u32 [#allocation6], 4
      %s31 = int_to_ptr.vmem [resolvable:$true] %s30
      %33 = dma.hbm_to_vmem [thread:$0]  %s2, 16, %s31, [#allocation3]
    $region13: #{tpu_custom_call.1} parent=1 // pred_fallthru
      _
    // Predicated region
    $region14: #{tpu_custom_call.1} parent=1 // pred_check
      _
    $region15: #{tpu_custom_call.1} parent=1 // pred_check_branch
      %35 = sbr.rel (0) target = $region17
    $region16: #{tpu_custom_call.1} parent=1 // pred_region
      _
    $region17: #{tpu_custom_call.1} parent=1 // pred_fallthru
      _
    // Predicated region
    $region18: #{tpu_custom_call.1} parent=1 // pred_check
      _
    $region19: #{tpu_custom_call.1} parent=1 // pred_check_branch
      %37 = sbr.rel (0) target = $region21
    $region20: #{tpu_custom_call.1} parent=1 // pred_region
      %s39 = ssub.s32 64, 64
      %40 = vsyncadd [#allocation8], %s39
      %s42 = sshll.u32 [#allocation7], 4
      %s43 = int_to_ptr.vmem [resolvable:$true] %s42
      %45 = dma.hbm_to_vmem [thread:$0]  %s4, 64, %s43, [#allocation8]
    $region21: #{tpu_custom_call.1} parent=1 // pred_fallthru
      _
    // Predicated region
    $region22: #{tpu_custom_call.1} parent=1 // pred_check
      _
    $region23: #{tpu_custom_call.1} parent=1 // pred_check_branch
      %47 = sbr.rel (0) target = $region25
    $region24: #{tpu_custom_call.1} parent=1 // pred_region
      %48 = dma.done [#allocation5], 16
    $region25: #{tpu_custom_call.1} parent=1 // pred_fallthru
      _
    // Predicated region
    $region26: #{tpu_custom_call.1} parent=1 // pred_check
      _
    $region27: #{tpu_custom_call.1} parent=1 // pred_check_branch
      %50 = sbr.rel (0) target = $region29
    $region28: #{tpu_custom_call.1} parent=1 // pred_region
      %51 = dma.done [#allocation3], 16
    $region29: #{tpu_custom_call.1} parent=1 // pred_fallthru
      _
    // Predicated region
    $region30: #{tpu_custom_call.1} parent=1 // pred_check
      _
    $region31: #{tpu_custom_call.1} parent=1 // pred_check_branch
      %53 = sbr.rel (0) target = $region33
    $region32: #{tpu_custom_call.1} parent=1 // pred_region
      %54 = dma.done [#allocation8], 64
    $region33: #{tpu_custom_call.1} parent=1 // pred_fallthru
      _
    %55 = sfence
    %s56 = sld [smem:[#allocation2]]
    %s57 = sld [smem:[#allocation2 + $0x1]]
    %v58 = vld [vmem:[%s1] sm:$0x1]
    %v59 = vld [vmem:[#allocation6] sm:$0x1]
    %v60 = vlog2.pop %v58
    %v61 = vmul.f32 %v60, 0.6931472
    %v62 = vmax.f32 %v61, -100.0
    %v63 = vsub.f32 1.0, %v58
    %v64 = vlog2.pop %v63
    %v65 = vmul.f32 %v64, 0.6931472
    %v66 = vmax.f32 %v65, -100.0
    %v67 = vmul.f32 %v59, %v62
    %v68 = vsub.f32 1.0, %v59
    %v69 = vmul.f32 %v68, %v66
    %v70 = vadd.f32 %v67, %v69
    %v71 = vsub.f32 0.0, %v70
    %vm72 = vcmask 57344
    %v73 = vsel %vm72, %v71, 0.0
    %74 = vadd.xlane.f32.xlu0 %v73
    %v75 = vpop.xlane.xlu0 %74
    %v76 = vrot.slane %v75, 4
    %v77 = vadd.f32 %v75, %v76
    %v78 = vrot.slane %v77, 2
    %v79 = vadd.f32 %v77, %v78
    %v80 = vrot.slane %v79, 1
    %v81 = vadd.f32 %v79, %v80
    %s82 = vtos %v81
    %v83 = vstv %s82
    %v84 = vrcp.pop 8.0
    %v85 = vmul.f32 %v83, %v84
    %v86 = vld [vmem:[%s3] sm:$0xf]
    %v87 = vld [vmem:[#allocation7] sm:$0xf]
    %vm88 = vcmask 261120
    %v90 = vsel %vm88, %v86, 0
    %v93 = vsel %vm88, %v87, 0
    %95 = vmatprep.subr.mxu0 0.0
    %96 = vmatpush1.xpose.msra.mxu0 0.0
    %97 = vmatprep.subr.mxu0 0.0
    %98 = vmatpush1.xpose.msra.mxu0 0.0
    %99 = vmatprep.subr.mxu0 0.0
    %100 = vmatpush1.xpose.msra.mxu0 0.0
    %101 = vmatprep.subr.mxu0 0.0
    %102 = vmatpush1.xpose.msra.mxu0 0.0
    %103 = vmatprep.subr.mxu0 0.0
    %104 = vmatpush1.xpose.msra.mxu0 0.0
    %105 = vmatprep.subr.mxu0 0.0
    %106 = vmatpush1.xpose.msra.mxu0 0.0
    %107 = vmatprep.subr.mxu0 0.0
    %108 = vmatpush1.xpose.msra.mxu0 0.0
    %109 = vmatprep.subr.mxu0 0.0
    %110 = vmatpush1.xpose.msra.mxu0 0.0
    %111 = vmatprep.subr.mxu0 0.0
    %112 = vmatpush1.xpose.msra.mxu0 0.0
    %113 = vmatprep.subr.mxu0 0.0
    %114 = vmatpush1.xpose.msra.mxu0 0.0
    %115 = vmatprep.subr.mxu0 0.0
    %116 = vmatpush1.xpose.msra.mxu0 0.0
    %117 = vmatprep.subr.mxu0 0.0
    %118 = vmatpush1.xpose.msra.mxu0 0.0
    %119 = vmatprep.subr.mxu0 0.0
    %120 = vmatpush1.xpose.msra.mxu0 0.0
    %121 = vmatprep.subr.mxu0 0.0
    %122 = vmatpush1.xpose.msra.mxu0 0.0
    %123 = vmatprep.subr.mxu0 0.0
    %124 = vmatpush1.xpose.msra.mxu0 0.0
    %125 = vmatprep.subr.mxu0 0.0
    %126 = vmatpush1.xpose.msra.mxu0 %v93
    %127 = vmatprep.subr.mxu0 0.0
    %128 = vmatpush2.xpose.msra.mxu0 0.0
    %129 = vmatprep.subr.mxu0 0.0
    %130 = vmatpush2.xpose.msra.mxu0 0.0
    %131 = vmatprep.subr.mxu0 0.0
    %132 = vmatpush2.xpose.msra.mxu0 0.0
    %133 = vmatprep.subr.mxu0 0.0
    %134 = vmatpush2.xpose.msra.mxu0 0.0
    %135 = vmatprep.subr.mxu0 0.0
    %136 = vmatpush2.xpose.msra.mxu0 0.0
    %137 = vmatprep.subr.mxu0 0.0
    %138 = vmatpush2.xpose.msra.mxu0 0.0
    %139 = vmatprep.subr.mxu0 0.0
    %140 = vmatpush2.xpose.msra.mxu0 0.0
    %141 = vmatprep.subr.mxu0 0.0
    %142 = vmatpush2.xpose.msra.mxu0 0.0
    %143 = vmatprep.subr.mxu0 0.0
    %144 = vmatpush2.xpose.msra.mxu0 0.0
    %145 = vmatprep.subr.mxu0 0.0
    %146 = vmatpush2.xpose.msra.mxu0 0.0
    %147 = vmatprep.subr.mxu0 0.0
    %148 = vmatpush2.xpose.msra.mxu0 0.0
    %149 = vmatprep.subr.mxu0 0.0
    %150 = vmatpush2.xpose.msra.mxu0 0.0
    %151 = vmatprep.subr.mxu0 0.0
    %152 = vmatpush2.xpose.msra.mxu0 0.0
    %153 = vmatprep.subr.mxu0 0.0
    %154 = vmatpush2.xpose.msra.mxu0 0.0
    %155 = vmatprep.subr.mxu0 0.0
    %156 = vmatpush2.xpose.msra.mxu0 0.0
    %157 = vmatprep.subr.mxu0 0.0
    %158 = vmatpush2.xpose.msra.mxu0 0.0
    %159 = vmatprep.mubr.f32.mxu0 0.0
    %160 = vmatmul.mubr.f32.gmra.mxu0 %v90
    %v161 = vpop.f32.mrf.mxu0
    %v162 = vadd.f32 0.0, %v161
    %v163 = vpop.f32.mrf.mxu0
    %164 = vdwg.mxu0
    %v165 = vmul.f32 %v86, %v86
    %vm166 = vcmask 257024
    %v167 = vsel %vm166, %v165, 0.0
    %168 = vadd.xlane.f32.xlu0 %v167
    %v169 = vpop.xlane.xlu0 %168
    %v170 = vmul.f32 %v87, %v87
    %v172 = vsel %vm88, 1.0, 0
    %v175 = vsel %vm88, %v170, 0
    %177 = vmatprep.subr.mxu0 0.0
    %178 = vmatpush1.xpose.msra.mxu0 0.0
    %179 = vmatprep.subr.mxu0 0.0
    %180 = vmatpush1.xpose.msra.mxu0 0.0
    %181 = vmatprep.subr.mxu0 0.0
    %182 = vmatpush1.xpose.msra.mxu0 0.0
    %183 = vmatprep.subr.mxu0 0.0
    %184 = vmatpush1.xpose.msra.mxu0 0.0
    %185 = vmatprep.subr.mxu0 0.0
    %186 = vmatpush1.xpose.msra.mxu0 0.0
    %187 = vmatprep.subr.mxu0 0.0
    %188 = vmatpush1.xpose.msra.mxu0 0.0
    %189 = vmatprep.subr.mxu0 0.0
    %190 = vmatpush1.xpose.msra.mxu0 0.0
    %191 = vmatprep.subr.mxu0 0.0
    %192 = vmatpush1.xpose.msra.mxu0 0.0
    %193 = vmatprep.subr.mxu0 0.0
    %194 = vmatpush1.xpose.msra.mxu0 0.0
    %195 = vmatprep.subr.mxu0 0.0
    %196 = vmatpush1.xpose.msra.mxu0 0.0
    %197 = vmatprep.subr.mxu0 0.0
    %198 = vmatpush1.xpose.msra.mxu0 0.0
    %199 = vmatprep.subr.mxu0 0.0
    %200 = vmatpush1.xpose.msra.mxu0 0.0
    %201 = vmatprep.subr.mxu0 0.0
    %202 = vmatpush1.xpose.msra.mxu0 0.0
    %203 = vmatprep.subr.mxu0 0.0
    %204 = vmatpush1.xpose.msra.mxu0 0.0
    %205 = vmatprep.subr.mxu0 0.0
    %206 = vmatpush1.xpose.msra.mxu0 0.0
    %207 = vmatprep.subr.mxu0 0.0
    %208 = vmatpush1.xpose.msra.mxu0 %v175
    %209 = vmatprep.subr.mxu0 0.0
    %210 = vmatpush2.xpose.msra.mxu0 0.0
    %211 = vmatprep.subr.mxu0 0.0
    %212 = vmatpush2.xpose.msra.mxu0 0.0
    %213 = vmatprep.subr.mxu0 0.0
    %214 = vmatpush2.xpose.msra.mxu0 0.0
    %215 = vmatprep.subr.mxu0 0.0
    %216 = vmatpush2.xpose.msra.mxu0 0.0
    %217 = vmatprep.subr.mxu0 0.0
    %218 = vmatpush2.xpose.msra.mxu0 0.0
    %219 = vmatprep.subr.mxu0 0.0
    %220 = vmatpush2.xpose.msra.mxu0 0.0
    %221 = vmatprep.subr.mxu0 0.0
    %222 = vmatpush2.xpose.msra.mxu0 0.0
    %223 = vmatprep.subr.mxu0 0.0
    %224 = vmatpush2.xpose.msra.mxu0 0.0
    %225 = vmatprep.subr.mxu0 0.0
    %226 = vmatpush2.xpose.msra.mxu0 0.0
    %227 = vmatprep.subr.mxu0 0.0
    %228 = vmatpush2.xpose.msra.mxu0 0.0
    %229 = vmatprep.subr.mxu0 0.0
    %230 = vmatpush2.xpose.msra.mxu0 0.0
    %231 = vmatprep.subr.mxu0 0.0
    %232 = vmatpush2.xpose.msra.mxu0 0.0
    %233 = vmatprep.subr.mxu0 0.0
    %234 = vmatpush2.xpose.msra.mxu0 0.0
    %235 = vmatprep.subr.mxu0 0.0
    %236 = vmatpush2.xpose.msra.mxu0 0.0
    %237 = vmatprep.subr.mxu0 0.0
    %238 = vmatpush2.xpose.msra.mxu0 0.0
    %239 = vmatprep.subr.mxu0 0.0
    %240 = vmatpush2.xpose.msra.mxu0 0.0
    %241 = vmatprep.mubr.f32.mxu0 0.0
    %242 = vmatmul.mubr.f32.gmra.mxu0 %v172
    %v243 = vpop.f32.mrf.mxu0
    %v244 = vadd.f32 0.0, %v243
    %v245 = vpop.f32.mrf.mxu0
    %246 = vdwg.mxu0
    %v247 = vmul.f32 %v162, 2.0
    %v248 = vsub.f32 %v247, %v169
    %v249 = vlaneseq
    %v250 = vshrl.u32 %v249, 7
    %v251 = vsub.s32 0, %v250
    %v252 = vrot.slane %v244, %v251
    %v253 = vsub.f32 %v248, %v252
    %v254 = vmin.f32 %v253, 0.0
    %v255 = vmul.f32 %v254, 1000.0
    // While loop
    $region34: #{tpu_custom_call.1} parent=1 // loop_pre_header
      _
    $region35: #{tpu_custom_call.1} parent=1 // loop_header
      %s257 = sphi 0, %s321
      %v258 = vphi 0.0, %v283
      %v259 = vphi 0.0, %v306
      %s260 = sphi inf, %s320
      %p261 = scmp.lt.s32.totalorder %s257, 100
      %p262 = scmp.ge.f32.partialorder %s260, 0.1
      %p263 = pnand %p261, %p262
      %p264 = pneg %p263
    $region36: #{tpu_custom_call.1} parent=1 // loop_header_branch
      %266 = sbr.rel (%p263) target = $region40
    $region37: #{tpu_custom_call.1} parent=1 // loop_body
      %v267 = vadd.f32 %v255, %v259
      %v268 = vadd.f32 %v267, %v258
      %vm269 = vcmask 27648
      %v270 = vsel %vm269, %v268, -inf
      %271 = vmax.xlane.f32.xlu0 %v270
      %v272 = vpop.xlane.xlu0 %271
      %v273 = vsub.f32 %v268, %v272
      %v274 = vmul.f32 %v273, 1.442695
      %v275 = vpow.pop %v274
      %v276 = vsel %vm269, %v275, 0.0
      %277 = vadd.xlane.f32.xlu0 %v276
      %v278 = vpop.xlane.xlu0 %277
      %v279 = vlog2.pop %v278
      %v280 = vmul.f32 %v279, 0.6931472
      %v281 = vadd.f32 %v272, %v280
      %v282 = vsub.f32 -1.3862944, %v281
      %v283 = vadd.f32 %v282, %v258
      %v284 = vadd.f32 %v267, %v283
      %v285 = vsel %vm269, %v284, -inf
      %v286 = vrot.slane %v285, 4
      %v287 = vmax.f32 %v285, %v286
      %v288 = vrot.slane %v287, 2
      %v289 = vmax.f32 %v287, %v288
      %v290 = vrot.slane %v289, 1
      %v291 = vmax.f32 %v289, %v290
      %v292 = vsub.f32 %v284, %v291
      %v293 = vmul.f32 %v292, 1.442695
      %v294 = vpow.pop %v293
      %v295 = vsel %vm269, %v294, 0.0
      %v296 = vrot.slane %v295, 4
      %v297 = vadd.f32 %v295, %v296
      %v298 = vrot.slane %v297, 2
      %v299 = vadd.f32 %v297, %v298
      %v300 = vrot.slane %v299, 1
      %v301 = vadd.f32 %v299, %v300
      %v302 = vlog2.pop %v301
      %v303 = vmul.f32 %v302, 0.6931472
      %v304 = vadd.f32 %v291, %v303
      %v305 = vsub.f32 -1.3862944, %v304
      %v306 = vadd.f32 %v305, %v259
      %v307 = vsub.f32 %v283, %v258
      %v308 = vand.u32 2147483647, %v307
      %vm309 = vcmask 3072
      %v310 = vsel %vm309, %v308, 0.0
      %311 = vadd.xlane.f32.xlu0 %v310
      %v312 = vpop.xlane.xlu0 %311
      %v313 = vrot.slane %v312, 4
      %v314 = vadd.f32 %v312, %v313
      %v315 = vrot.slane %v314, 2
      %v316 = vadd.f32 %v314, %v315
      %v317 = vrot.slane %v316, 1
      %v318 = vadd.f32 %v316, %v317
      %s319 = vtos %v318
      %s320 = smul.f32 %s319, 0.001
      %s321 = sadd.s32 %s257, 1
    $region38: #{tpu_custom_call.1} parent=1 // loop_footer
      _
    $region39: #{tpu_custom_call.1} parent=1 // loop_footer_branch
      %256 = sbr.rel target = $region35
    $region40: #{tpu_custom_call.1} parent=1 // loop_exit
      _
    %v322 = vadd.f32 %v255, %v258
    %v323 = vadd.f32 %v322, %v259
    %v324 = vmul.f32 %v323, 1.442695
    %v325 = vpow.pop %v324
    %v326 = vmul.f32 %v325, %v255
    %vm327 = vcmask 27648
    %v328 = vsel %vm327, %v326, 0.0
    %329 = vadd.xlane.f32.xlu0 %v328
    %v330 = vpop.xlane.xlu0 %329
    %v331 = vrot.slane %v330, 4
    %v332 = vadd.f32 %v330, %v331
    %v333 = vrot.slane %v332, 2
    %v334 = vadd.f32 %v332, %v333
    %v335 = vrot.slane %v334, 1
    %v336 = vadd.f32 %v334, %v335
    %s337 = vtos %v336
    %v338 = vstv %s337
    %v339 = vmul.f32 %v338, -0.001
    %v340 = vstv %s57
    %v341 = vmul.f32 %v340, %v85
    %v342 = vstv %s56
    %v343 = vmul.f32 %v342, %v339
    %v344 = vadd.f32 %v341, %v343
    %vm345 = vcmask 0
    %346 = vst.msk [vmem:[#allocation9] sm:$0x1] %vm345, %v344
    // Predicated region
    $region41: #{tpu_custom_call.1} parent=1 // pred_check
      _
    $region42: #{tpu_custom_call.1} parent=1 // pred_check_branch
      %348 = sbr.rel (0) target = $region44
    $region43: #{tpu_custom_call.1} parent=1 // pred_region
      %s350 = ssub.s32 16, 16
      %351 = vsyncadd [#allocation4], %s350
      %s353 = sshll.u32 [#allocation9], 4
      %s354 = int_to_ptr.vmem [resolvable:$true] %s353
      %356 = dma.vmem_to_hbm [thread:$0]  %s354, 16, %s5, [#allocation4]
    $region44: #{tpu_custom_call.1} parent=1 // pred_fallthru
      _
    // Predicated region
    $region45: #{tpu_custom_call.1} parent=1 // pred_check
      _
    $region46: #{tpu_custom_call.1} parent=1 // pred_check_branch
      %358 = sbr.rel (0) target = $region48
    $region47: #{tpu_custom_call.1} parent=1 // pred_region
      %359 = dma.done [#allocation4], 16
    $region48: #{tpu_custom_call.1} parent=1 // pred_fallthru
      _
    %360 = vsyncpa [#allocation3], 1
    %361 = vsyncpa [#allocation8], 1
    %362 = vsyncpa [#allocation4], 1
    %363 = vsyncpa [#allocation5], 1

</llo_original>
